<compile_context>
chip_gen: v7x
topology: tpu7x:2x2x1
jax: 0.10.0
libtpu: 0.0.40
codegen_flags: <defaults>
</compile_context>

<pallas_src>
import functools

import jax
import jax.numpy as jnp
from jax.experimental import pallas as pl
from jax.experimental.pallas import tpu as pltpu


_LANES = 128                    # full vreg lane width -> unmasked vst
_VMEM_LIMIT = 32 * 1024 * 1024  # safe scoped-VMEM budget on v5e/v6e/v7x


def _sublane_multiple(dtype):
    """Native sublane tile height for a dtype: 8 (f32), 16 (bf16), 32 (i8/fp8)."""
    itemsize = jnp.dtype(dtype).itemsize
    return max(8, 32 // max(int(itemsize), 1))


@functools.lru_cache(maxsize=None)
def _chip_config():
    """Returns (max_row_tile_rows_f32, num_parallel_tensorcores)."""
    max_row_tile, num_tc = 2048, 1          # v5e / v6e defaults (~1 MiB blocks)
    try:
        info = pltpu.get_tpu_info()
        vmem_bytes = int(getattr(info, "vmem_capacity_bytes", 0) or 0)
        # v7x: 64 MiB VMEM per TensorCore, 2 TCs/chip, ~3.2 TB/s HBM ->
        # bigger (2 MiB) blocks and make sure the parallel grid has >= 2 steps.
        if 0 < vmem_bytes <= 64 * 1024 * 1024:
            max_row_tile, num_tc = 4096, 2
    except Exception:
        pass
    return max_row_tile, num_tc


def _pick_row_tile(rows, sub, max_tile, min_grid):
    """Largest sublane-aligned tile <= max_tile, with >= min_grid grid steps."""
    tile = min(int(max_tile), int(rows))
    tile = max(sub, (tile // sub) * sub)
    while min_grid > 1 and -(-rows // tile) < min_grid and tile > sub:
        tile = max(sub, ((tile // 2) // sub) * sub)
    return tile


# ----------------------------------------------------------------------------
# Kernel 1: the module's forward() — elementwise EMA update.
# ----------------------------------------------------------------------------
def _ema_forward_kernel(mu_ref, x_ref, prev_ref, o_ref):
    # mu_ref:   (1,) f32 in SMEM (runtime scalar -> no recompile per mu)
    # x_ref, prev_ref, o_ref: (row_tile, 128) lane-dense VMEM tiles.
    mu = mu_ref[0]
    x = x_ref[...].astype(jnp.float32)
    p = prev_ref[...].astype(jnp.float32)
    o_ref[...] = (mu * x + (1.0 - mu) * p).astype(o_ref.dtype)


def ema_forward(x, last_average, mu):
    """Elementwise EMA step. Any shape; returns promoted dtype, x's shape."""
    out_dtype = jnp.promote_types(x.dtype, last_average.dtype)
    orig_shape = x.shape
    total = int(x.size)

    max_row_tile, num_tc = _chip_config()
    sub = _sublane_multiple(out_dtype)
    rows = -(-total // _LANES)                 # ceil to lane width
    rows = ((rows + sub - 1) // sub) * sub     # only the (sub, 128) minimum
    row_tile = _pick_row_tile(rows, sub, max_row_tile, min_grid=num_tc)
    padded = rows * _LANES

    xf = x.astype(out_dtype).reshape(-1)
    pf = last_average.astype(out_dtype).reshape(-1)
    if padded != total:
        # Only the small lane/sublane tail (< sub*128 elements) is ever padded.
        xf = jnp.pad(xf, (0, padded - total))
        pf = jnp.pad(pf, (0, padded - total))
    x2 = xf.reshape(rows, _LANES)
    p2 = pf.reshape(rows, _LANES)
    mu_arr = jnp.asarray([mu], dtype=jnp.float32)

    out = pl.pallas_call(
        _ema_forward_kernel,
        out_shape=jax.ShapeDtypeStruct((rows, _LANES), out_dtype),
        grid=(pl.cdiv(rows, row_tile),),       # partial last block is masked
        in_specs=[
            pl.BlockSpec(memory_space=pltpu.MemorySpace.SMEM),     # mu
            pl.BlockSpec((row_tile, _LANES), lambda i: (i, 0)),    # x
            pl.BlockSpec((row_tile, _LANES), lambda i: (i, 0)),    # last_average
        ],
        out_specs=pl.BlockSpec((row_tile, _LANES), lambda i: (i, 0)),
        # EMA state update is inherently in-place: alias last_average -> output.
        # (Zero-copy when the surrounding jit donates the state buffer;
        #  XLA inserts a defensive copy otherwise, so it is always safe.)
        input_output_aliases={2: 0},
        compiler_params=pltpu.CompilerParams(
            dimension_semantics=("parallel",),
            vmem_limit_bytes=_VMEM_LIMIT,
        ),
    )(mu_arr, x2, p2)
    return out.reshape(-1)[:total].reshape(orig_shape)


# ----------------------------------------------------------------------------
# Kernel 2: fused predict() — closed-form weighted reduction over T,
# with T folded into the input block (purely "parallel" grid, no accumulator).
# ----------------------------------------------------------------------------
def _ema_predict_kernel(coef_ref, x_ref, o_ref):
    # coef_ref: (T,) f32 in SMEM (closed-form EMA weights, runtime data)
    # x_ref:    (1, T, r_tile, 128) input block for (batch b, row-tile j)
    # o_ref:    (1, r_tile, 128) output block
    t_len = x_ref.shape[1]
    acc = coef_ref[0] * x_ref[0, 0].astype(jnp.float32)
    for t in range(1, t_len):                   # small static unroll over T
        acc = acc + coef_ref[t] * x_ref[0, t].astype(jnp.float32)
    o_ref[0] = acc.astype(o_ref.dtype)


def ema_predict(X_btmnd, window_len, mu):
    """X: (b, t, m, n, d) -> (b, 1, d, m, n), matching torch predict()."""
    B, T, M, N, D = X_btmnd.shape
    w = int(window_len)
    if w - 1 > T:
        # The torch recurrence would index X[:, t-1] past the time axis.
        raise ValueError(f"window_len-1 ({w - 1}) exceeds time length ({T})")

    # Closed-form coefficients of the (mean-seeded) EMA recurrence:
    #   pred = (1-mu)^(w-1) * mean_s(x_s) + sum_{s=0}^{w-2} mu*(1-mu)^(w-2-s) * x_s
    mu_f = float(mu)
    omm = 1.0 - mu_f
    coefs = []
    for s in range(T):
        c = (omm ** (w - 1)) / T
        if s <= w - 2:
            c += mu_f * (omm ** (w - 2 - s))
        coefs.append(c)
    coefs = jnp.asarray(coefs, dtype=jnp.float32)

    # Keep X in native memory order (no host transpose of the big tensor):
    # flatten (m, n, d) into a lane-dense axis; pad only if F isn't aligned.
    F = M * N * D
    sub = _sublane_multiple(X_btmnd.dtype)
    max_row_tile, num_tc = _chip_config()
    itemsize = int(jnp.dtype(X_btmnd.dtype).itemsize)
    R = -(-F // _LANES)
    R = ((R + sub - 1) // sub) * sub
    F_pad = R * _LANES
    # Budget the (T-deep) input block to the same bytes as a forward row tile.
    budget_rows = max(sub, (max_row_tile * 4) // (max(T, 1) * itemsize))
    min_grid = max(1, -(-num_tc // max(B, 1)))
    r_tile = _pick_row_tile(R, sub, budget_rows, min_grid)

    xf = X_btmnd.reshape(B, T, F)
    if F_pad != F:
        xf = jnp.pad(xf, ((0, 0), (0, 0), (0, F_pad - F)))
    x4 = xf.reshape(B, T, R, _LANES)

    out = pl.pallas_call(
        _ema_predict_kernel,
        out_shape=jax.ShapeDtypeStruct((B, R, _LANES), X_btmnd.dtype),
        grid=(B, pl.cdiv(R, r_tile)),
        in_specs=[
            pl.BlockSpec(memory_space=pltpu.MemorySpace.SMEM),            # coefs
            pl.BlockSpec((1, T, r_tile, _LANES), lambda b, j: (b, 0, j, 0)),
        ],
        out_specs=pl.BlockSpec((1, r_tile, _LANES), lambda b, j: (b, j, 0)),
        compiler_params=pltpu.CompilerParams(
            dimension_semantics=("parallel", "parallel"),
            vmem_limit_bytes=_VMEM_LIMIT,
        ),
    )(coefs, x4)

    # Only the T-times-smaller output is permuted to the torch layout.
    pred = out.reshape(B, F_pad)[:, :F].reshape(B, M, N, D)
    pred = jnp.transpose(pred, (0, 3, 1, 2))[:, None]   # (b, 1, d, m, n)
    return pred


# ----------------------------------------------------------------------------
# Pure-JAX references for correctness checking (intended semantics).
# ----------------------------------------------------------------------------
def _ref_forward(x, prev, mu):
    return mu * x + (1.0 - mu) * prev


def _ref_predict(X_btmnd, window_len, mu):
    x = jnp.transpose(X_btmnd, (0, 1, 4, 2, 3))   # (b, t, d, m, n)
    pred = jnp.mean(x, axis=1)                    # seed: mean over time
    for t in range(1, window_len):
        pred = mu * x[:, t - 1] + (1.0 - mu) * pred
    return pred[:, None]                          # (b, 1, d, m, n)


# TODO(synk): fit()/score()/compute_loss (MSE + host round-trips) are training
# utilities, not part of the forward pass; they are left to plain JAX/NumPy.


if __name__ == "__main__":
    # Hyperparameters from __init__ (no learnable weights in this module).
    constant_params = {"window_len": 8}
    finetune_params = {}
    window_len = constant_params["window_len"]
    mu = finetune_params.get("mu", 2.0 / (window_len + 1))

    # Small deterministic inputs: X is (b, t, m, n, d).
    b, t, m, n, d = 2, window_len, 16, 16, 4
    key = jax.random.PRNGKey(0)
    k1, k2 = jax.random.split(key)
    X = jax.random.normal(k1, (b, t, m, n, d), dtype=jnp.float32)

    # --- forward() kernel (single EMA step) ---
    x_step = jnp.transpose(X, (0, 1, 4, 2, 3))[:, 0]          # (b, d, m, n)
    last_avg = jax.random.normal(k2, (b, d, m, n), dtype=jnp.float32)
    fwd_ref = _ref_forward(x_step, last_avg, mu)              # ref first
    fwd = jax.block_until_ready(ema_forward(x_step, last_avg, mu))
    assert fwd.shape == (b, d, m, n)
    assert jnp.allclose(fwd, fwd_ref, atol=1e-5, rtol=1e-5)

    # --- predict() fused kernel (mean seed + EMA window, closed form) ---
    pred_ref = _ref_predict(X, window_len, mu)
    pred = jax.block_until_ready(ema_predict(X, window_len, mu))
    assert pred.shape == (b, 1, d, m, n)
    assert jnp.allclose(pred, pred_ref, atol=1e-5, rtol=1e-5)

    print("KERNEL_OK")
</pallas_src>

<mosaic_0001>
module attributes {stable_mosaic.version = 11 : i64} {
  func.func @_ema_forward_kernel(%arg0: i32, %arg1: memref<1xf32, #tpu.memory_space<smem>>, %arg2: memref<16x128xf32, #tpu.memory_space<vmem>>, %arg3: memref<16x128xf32, #tpu.memory_space<vmem>>, %arg4: memref<16x128xf32, #tpu.memory_space<vmem>>) attributes {dimension_semantics = [#tpu.dimension_semantics<parallel>], iteration_bounds = array<i64: 1>, scalar_prefetch = 0 : i64, scratch_operands = 0 : i64, tpu.core_type = #tpu.core_type<tc>, window_params = [{transform_indices = @transform_0, window_bounds = array<i64: 1>}, {transform_indices = @transform_1, window_bounds = array<i64: 16, 128>}, {transform_indices = @transform_2, window_bounds = array<i64: 16, 128>}, {transform_indices = @transform_3, window_bounds = array<i64: 16, 128>}]} {
    %c0 = arith.constant 0 : index
    %0 = memref.load %arg1[%c0] : memref<1xf32, #tpu.memory_space<smem>>
    %c0_0 = arith.constant 0 : index
    %c0_1 = arith.constant 0 : index
    %1 = vector.load %arg2[%c0_0, %c0_1] : memref<16x128xf32, #tpu.memory_space<vmem>>, vector<16x128xf32>
    %c0_2 = arith.constant 0 : index
    %c0_3 = arith.constant 0 : index
    %2 = vector.load %arg3[%c0_2, %c0_3] : memref<16x128xf32, #tpu.memory_space<vmem>>, vector<16x128xf32>
    %3 = vector.broadcast %0 : f32 to vector<16x128xf32>
    %4 = arith.mulf %3, %1 : vector<16x128xf32>
    %cst = arith.constant 1.000000e+00 : f32
    %5 = arith.subf %cst, %0 : f32
    %6 = vector.broadcast %5 : f32 to vector<16x128xf32>
    %7 = arith.mulf %6, %2 : vector<16x128xf32>
    %8 = arith.addf %4, %7 : vector<16x128xf32>
    %c0_4 = arith.constant 0 : index
    %c0_5 = arith.constant 0 : index
    %9 = vector.load %arg4[%c0_4, %c0_5] : memref<16x128xf32, #tpu.memory_space<vmem>>, vector<16x128xf32>
    tpu.vector_store %arg4[%c0_4, %c0_5], %8 {strides = array<i32>} : memref<16x128xf32, #tpu.memory_space<vmem>>, vector<16x128xf32>,
    return
  }
  func.func @transform_0(%arg0: i32) -> i32 {
    %c0_i32 = arith.constant 0 : i32
    %c0_i32_0 = arith.constant 0 : i32
    return %c0_i32 : i32
  }
  func.func @transform_1(%arg0: i32) -> (i32, i32) {
    %c0_i32 = arith.constant 0 : i32
    %c0_i32_0 = arith.constant 0 : i32
    return %arg0, %c0_i32 : i32, i32
  }
  func.func @transform_2(%arg0: i32) -> (i32, i32) {
    %c0_i32 = arith.constant 0 : i32
    %c0_i32_0 = arith.constant 0 : i32
    return %arg0, %c0_i32 : i32, i32
  }
  func.func @transform_3(%arg0: i32) -> (i32, i32) {
    %c0_i32 = arith.constant 0 : i32
    %c0_i32_0 = arith.constant 0 : i32
    return %arg0, %c0_i32 : i32, i32
  }
}

</mosaic_0001>

<llo_original>
// kernel: tpu_custom_call.1
$region0: #{tpu_custom_call.1}
  #allocation0 [shape = 'u32[]', space=smem, size = 0x4, offset = 0x4, fixed_abs, tag = 'smem constant byte address 0x4 - core index']
  #allocation1 [shape = 'u32[144,128]{1,0:T(1,128)}', space=vmem, size = 0x12000, scoped, tag = 'internal scratch']
  #allocation2 [shape = 'f32[1]{0:T(128)S(6)}', space=smem, size = 0x200, scoped, tag = 'scoped memory for tpu_custom_call.1']
  %s0 = inlined_call_operand.<no memory space> [shape: f32[1], index: 0, kind: input, shape index: {}]
  %s1 = inlined_call_operand.vmem [shape: f32[16,128], index: 1, kind: input, shape index: {}]
  %s2 = inlined_call_operand.hbm [shape: f32[16,128], index: 2, kind: input, shape index: {}, may-alias: {2,3}]
  %s3 = inlined_call_operand.hbm [shape: f32[16,128], index: 3, kind: output, shape index: {}, may-alias: {2,3}]
  %s4 = sld [smem:[#allocation0]]
  $region26: #{tpu_custom_call.1} parent=0
    _
  %s6 = ssub.s32 1, %s4
  %s7 = scalar_select 0, %s6, %s4
  %8 = sst [smem:[#allocation2]] %s0
  $region1: #{tpu_custom_call.1} parent=0
    #allocation3 [shape = 'u8[8192]{0}', space=vmem, size = 0x2000, scoped, tag = 'input window, operand 2, single buffered']
    #allocation4 [shape = 's32[1]{0}', space=sflag, size = 0x4, scoped, tag = 'scoped memory for tpu_custom_call.1']
    #allocation5 [shape = 's32[1]{0}', space=sflag, size = 0x4, scoped, tag = 'scoped memory for tpu_custom_call.1']
    #allocation6 [shape = 'u8[8192]{0}', space=vmem, size = 0x2000, scoped, tag = 'output window, operand 0, single buffered']
    %9 = vsyncpa [#allocation4], 0
    %10 = vsyncpa [#allocation5], 0
    // Predicated region
    $region2: #{tpu_custom_call.1} parent=1 // pred_check
      _
    $region3: #{tpu_custom_call.1} parent=1 // pred_check_branch
      %12 = sbr.rel (0) target = $region5
    $region4: #{tpu_custom_call.1} parent=1 // pred_region
      _
    $region5: #{tpu_custom_call.1} parent=1 // pred_fallthru
      _
    // Predicated region
    $region6: #{tpu_custom_call.1} parent=1 // pred_check
      _
    $region7: #{tpu_custom_call.1} parent=1 // pred_check_branch
      %14 = sbr.rel (0) target = $region9
    $region8: #{tpu_custom_call.1} parent=1 // pred_region
      _
    $region9: #{tpu_custom_call.1} parent=1 // pred_fallthru
      _
    // Predicated region
    $region10: #{tpu_custom_call.1} parent=1 // pred_check
      _
    $region11: #{tpu_custom_call.1} parent=1 // pred_check_branch
      %16 = sbr.rel (0) target = $region13
    $region12: #{tpu_custom_call.1} parent=1 // pred_region
      %s18 = ssub.s32 256, 256
      %19 = vsyncadd [#allocation4], %s18
      %s20 = sshll.u32 [#allocation3], 4
      %s21 = int_to_ptr.vmem [resolvable:$true] %s20
      %26 = dma.hbm_to_vmem [thread:$0]  %s2, 256, %s21, [#allocation4], 128, 128, 8
    $region13: #{tpu_custom_call.1} parent=1 // pred_fallthru
      _
    // Predicated region
    $region14: #{tpu_custom_call.1} parent=1 // pred_check
      _
    $region15: #{tpu_custom_call.1} parent=1 // pred_check_branch
      %28 = sbr.rel (0) target = $region17
    $region16: #{tpu_custom_call.1} parent=1 // pred_region
      %29 = dma.done [#allocation4], 256
    $region17: #{tpu_custom_call.1} parent=1 // pred_fallthru
      _
    %s30 = sld [smem:[#allocation2]]
    %v31 = vld [vmem:[%s1] sm:$0xff]
    %v32 = vld [vmem:[%s1 + $0x8] sm:$0xff]
    %v33 = vld [vmem:[#allocation3] sm:$0xff]
    %v34 = vld [vmem:[#allocation3 + $0x8] sm:$0xff]
    %v35 = vstv %s30
    %v36 = vmul.f32 %v35, %v31
    %v37 = vmul.f32 %v35, %v32
    %s38 = ssub.f32 1.0, %s30
    %v39 = vstv %s38
    %v40 = vmul.f32 %v39, %v33
    %v41 = vmul.f32 %v39, %v34
    %v42 = vadd.f32 %v36, %v40
    %v43 = vadd.f32 %v37, %v41
    %44 = vst [vmem:[#allocation6] sm:$0xff] %v42
    %45 = vst [vmem:[#allocation6 + $0x8] sm:$0xff] %v43
    // Predicated region
    $region18: #{tpu_custom_call.1} parent=1 // pred_check
      _
    $region19: #{tpu_custom_call.1} parent=1 // pred_check_branch
      %47 = sbr.rel (0) target = $region21
    $region20: #{tpu_custom_call.1} parent=1 // pred_region
      %s49 = ssub.s32 256, 256
      %50 = vsyncadd [#allocation5], %s49
      %s51 = sshll.u32 [#allocation6], 4
      %s52 = int_to_ptr.vmem [resolvable:$true] %s51
      %57 = dma.vmem_to_hbm [thread:$0]  %s52, 256, %s3, [#allocation5], 128, 128, 8
    $region21: #{tpu_custom_call.1} parent=1 // pred_fallthru
      _
    // Predicated region
    $region22: #{tpu_custom_call.1} parent=1 // pred_check
      _
    $region23: #{tpu_custom_call.1} parent=1 // pred_check_branch
      %59 = sbr.rel (0) target = $region25
    $region24: #{tpu_custom_call.1} parent=1 // pred_region
      %60 = dma.done [#allocation5], 256
    $region25: #{tpu_custom_call.1} parent=1 // pred_fallthru
      _
    %61 = vsyncpa [#allocation4], 1
    %62 = vsyncpa [#allocation5], 1

</llo_original>
